<compile_context>
chip_gen: v6e
topology: v6e:2x2x1
jax: 0.10.0
libtpu: 0.0.40
codegen_flags: <defaults>
</compile_context>

<pallas_src>
import math

import jax
import jax.numpy as jnp
from jax.experimental import pallas as pl
from jax.experimental.pallas import tpu as pltpu


def _round_up(x: int, m: int) -> int:
    return ((x + m - 1) // m) * m


def _timestep_embedding_kernel(t_ref, freqs_ref, phase_ref, out_ref):
    # t_ref:     (tile_b, 1)       f32   timesteps column
    # freqs_ref: (1, tile_d)       f32   duplicated frequency row (resident)
    # phase_ref: (1, tile_d)       f32   0 for sin half, pi/2 for cos half
    # out_ref:   (tile_b, tile_d)  out dtype
    args = t_ref[...] * freqs_ref[...] + phase_ref[...]   # VPU broadcast mul/add
    # One full-width, unmasked store (cos(x) == sin(x + pi/2)).
    out_ref[...] = jnp.sin(args).astype(out_ref.dtype)


def timestep_embedding(timesteps: jax.Array, dim: int, *,
                       tile_b: int = 512,
                       out_dtype=jnp.float32) -> jax.Array:
    """Pallas equivalent of TimestepEmbedding(dim).forward(timesteps).

    timesteps: (B,) array. Returns (B, dim) `out_dtype` with
    out[:, :dim//2] = sin, out[:, dim//2:] = cos (matching torch.cat order).
    """
    assert dim % 2 == 0, "dim must be even (PyTorch module writes 2*(dim//2) columns)"
    assert dim >= 4, "dim >= 4 required (dim == 2 divides by zero, as in PyTorch)"
    half_dim = dim // 2
    B = timesteps.shape[0]

    # Constant tables computed once in plain JAX (bit-identical frequency math
    # to the PyTorch reference); duplicated so the kernel does a single
    # full-width sin pass and one unmasked store.
    log_scale = math.log(10000.0) / (half_dim - 1)
    freqs_half = jnp.exp(jnp.arange(half_dim, dtype=jnp.float32) * -log_scale)
    freqs_full = jnp.concatenate([freqs_half, freqs_half]).reshape(1, dim)
    phase = jnp.concatenate([
        jnp.zeros((half_dim,), jnp.float32),
        jnp.full((half_dim,), math.pi / 2.0, dtype=jnp.float32),
    ]).reshape(1, dim)

    t2d = timesteps.astype(jnp.float32).reshape(B, 1)

    # Sublane alignment: 16 rows for 16-bit output packing, 8 for f32.
    sub = 16 if jnp.dtype(out_dtype).itemsize == 2 else 8
    tile_b = max(sub, min(_round_up(tile_b, sub), _round_up(B, sub)))

    # Lane-axis split: for large dims give the megacore (v7x, 2 TCs) two
    # independent "parallel" blocks even when the batch grid collapses to 1.
    tile_d = dim
    if dim >= 1024 and dim % 256 == 0:
        tile_d = dim // 2  # multiple of 128 by construction

    # Explicit VMEM budget: double-buffered output + f32 elementwise
    # temporaries + tiny inputs. Cap tile_b so it fits comfortably on every
    # generation (v7x has only 64 MiB physical VMEM; v5e's scoped default is
    # small), then raise the scoped limit explicitly.
    out_isz = jnp.dtype(out_dtype).itemsize

    def _tile_bytes(tb: int, td: int) -> int:
        return (2 * tb * td * out_isz      # output double-buffer
                + 2 * tb * td * 4          # args / sin f32 temporaries
                + 2 * tb * 4               # timesteps column (double-buffered)
                + 4 * td * 4)              # freqs + phase rows

    vmem_budget = 40 << 20
    while tile_b > sub and _tile_bytes(tile_b, tile_d) > vmem_budget:
        tile_b = max(sub, _round_up(tile_b // 2, sub))
    vmem_limit = min(max(int(_tile_bytes(tile_b, tile_d) * 1.5) + (1 << 20),
                         32 << 20),
                     48 << 20)

    grid_b = pl.cdiv(B, tile_b)   # ragged final block masked by Pallas: no pad, no out[:B] copy
    grid_d = dim // tile_d

    out = pl.pallas_call(
        _timestep_embedding_kernel,
        out_shape=jax.ShapeDtypeStruct((B, dim), out_dtype),
        grid=(grid_b, grid_d),
        in_specs=[
            # (tile_b, 1): last dim equals full array dim, tile_b % 8 == 0.
            pl.BlockSpec((tile_b, 1), lambda i, j: (i, 0)),
            # Constant rows: tiled only along the lane axis, resident per column block.
            pl.BlockSpec((1, tile_d), lambda i, j: (0, j)),
            pl.BlockSpec((1, tile_d), lambda i, j: (0, j)),
        ],
        out_specs=pl.BlockSpec((tile_b, tile_d), lambda i, j: (i, j)),
        compiler_params=pltpu.CompilerParams(
            # All blocks independent -> shard across TensorCores on megacore.
            dimension_semantics=("parallel", "parallel"),
            vmem_limit_bytes=vmem_limit,
        ),
    )(t2d, freqs_full, phase)

    return out


def _reference(timesteps: jax.Array, dim: int) -> jax.Array:
    # Pure-JAX reference mirroring the PyTorch forward exactly.
    half_dim = dim // 2
    emb = math.log(10000.0) / (half_dim - 1)
    emb = jnp.exp(jnp.arange(half_dim, dtype=jnp.float32) * -emb)
    emb = timesteps.astype(jnp.float32)[:, None] * emb[None, :]
    return jnp.concatenate([jnp.sin(emb), jnp.cos(emb)], axis=-1)


if __name__ == "__main__":
    key = jax.random.PRNGKey(0)
    B, dim = 8, 32

    # Deterministic synthetic diffusion timesteps in [0, 1000).
    timesteps = jax.random.randint(key, (B,), minval=0, maxval=1000).astype(jnp.float32)

    out = timestep_embedding(timesteps, dim)
    out = jax.block_until_ready(out)

    ref = _reference(timesteps, dim)
    assert out.shape == (B, dim), out.shape
    # f32 sin/cos of angles up to ~1e3, plus the cos == sin(x + pi/2) fusion
    # (~1 extra ULP of argument error): allow ~2e-3 absolute slack.
    assert jnp.allclose(out, ref, atol=2e-3, rtol=2e-3), (
        "mismatch vs reference, max abs err = "
        f"{float(jnp.max(jnp.abs(out - ref)))}"
    )

    print("KERNEL_OK")
</pallas_src>

<mosaic_0001>
module attributes {stable_mosaic.version = 11 : i64} {
  func.func @_timestep_embedding_kernel(%arg0: i32, %arg1: i32, %arg2: memref<8x1xf32, #tpu.memory_space<vmem>>, %arg3: memref<1x32xf32, #tpu.memory_space<vmem>>, %arg4: memref<1x32xf32, #tpu.memory_space<vmem>>, %arg5: memref<8x32xf32, #tpu.memory_space<vmem>>) attributes {dimension_semantics = [#tpu.dimension_semantics<parallel>, #tpu.dimension_semantics<parallel>], iteration_bounds = array<i64: 1, 1>, scalar_prefetch = 0 : i64, scratch_operands = 0 : i64, tpu.core_type = #tpu.core_type<tc>, window_params = [{transform_indices = @transform_0, window_bounds = array<i64: 8, 1>}, {transform_indices = @transform_1, window_bounds = array<i64: 1, 32>}, {transform_indices = @transform_2, window_bounds = array<i64: 1, 32>}, {transform_indices = @transform_3, window_bounds = array<i64: 8, 32>}]} {
    %c0 = arith.constant 0 : index
    %c0_0 = arith.constant 0 : index
    %0 = vector.load %arg2[%c0, %c0_0] : memref<8x1xf32, #tpu.memory_space<vmem>>, vector<8x1xf32>
    %c0_1 = arith.constant 0 : index
    %c0_2 = arith.constant 0 : index
    %1 = vector.load %arg3[%c0_1, %c0_2] : memref<1x32xf32, #tpu.memory_space<vmem>>, vector<1x32xf32>
    %2 = vector.broadcast %0 : vector<8x1xf32> to vector<8x32xf32>
    %3 = vector.broadcast %1 : vector<1x32xf32> to vector<8x32xf32>
    %4 = arith.mulf %2, %3 : vector<8x32xf32>
    %c0_3 = arith.constant 0 : index
    %c0_4 = arith.constant 0 : index
    %5 = vector.load %arg4[%c0_3, %c0_4] : memref<1x32xf32, #tpu.memory_space<vmem>>, vector<1x32xf32>
    %6 = vector.broadcast %5 : vector<1x32xf32> to vector<8x32xf32>
    %7 = arith.addf %4, %6 : vector<8x32xf32>
    %8 = math.sin %7 : vector<8x32xf32>
    %c0_5 = arith.constant 0 : index
    %c0_6 = arith.constant 0 : index
    %9 = vector.load %arg5[%c0_5, %c0_6] : memref<8x32xf32, #tpu.memory_space<vmem>>, vector<8x32xf32>
    tpu.vector_store %arg5[%c0_5, %c0_6], %8 {strides = array<i32>} : memref<8x32xf32, #tpu.memory_space<vmem>>, vector<8x32xf32>,
    return
  }
  func.func @transform_0(%arg0: i32, %arg1: i32) -> (i32, i32) {
    %c0_i32 = arith.constant 0 : i32
    %c0_i32_0 = arith.constant 0 : i32
    return %arg0, %c0_i32 : i32, i32
  }
  func.func @transform_1(%arg0: i32, %arg1: i32) -> (i32, i32) {
    %c0_i32 = arith.constant 0 : i32
    %c0_i32_0 = arith.constant 0 : i32
    return %c0_i32, %arg1 : i32, i32
  }
  func.func @transform_2(%arg0: i32, %arg1: i32) -> (i32, i32) {
    %c0_i32 = arith.constant 0 : i32
    %c0_i32_0 = arith.constant 0 : i32
    return %c0_i32, %arg1 : i32, i32
  }
  func.func @transform_3(%arg0: i32, %arg1: i32) -> (i32, i32) {
    %c0_i32 = arith.constant 0 : i32
    return %arg0, %arg1 : i32, i32
  }
}

</mosaic_0001>

<llo_original>
// kernel: tpu_custom_call.1
$region0: #{tpu_custom_call.1}
  #allocation0 [shape = 'u32[]', space=smem, size = 0x4, offset = 0x4, fixed_abs, tag = 'smem constant byte address 0x4 - core index']
  #allocation1 [shape = 'u32[144,128]{1,0:T(1,128)}', space=vmem, size = 0x12000, scoped, tag = 'internal scratch']
  %s0 = inlined_call_operand.vmem [shape: f32[8,1], index: 0, kind: input, shape index: {}]
  %s1 = inlined_call_operand.vmem [shape: f32[1,32], index: 1, kind: input, shape index: {}]
  %s2 = inlined_call_operand.vmem [shape: f32[1,32], index: 2, kind: input, shape index: {}]
  %s3 = inlined_call_operand.hbm [shape: f32[8,32], index: 3, kind: output, shape index: {}]
  %s4 = sld [smem:[#allocation0]]
  $region22: #{tpu_custom_call.1} parent=0
    _
  %s6 = ssub.s32 1, %s4
  %s7 = scalar_select 0, %s6, %s4
  $region1: #{tpu_custom_call.1} parent=0
    #allocation2 [shape = 'u8[4096]{0}', space=vmem, size = 0x1000, scoped, tag = 'output window, operand 0, single buffered']
    #allocation3 [shape = 's32[1]{0}', space=sflag, size = 0x4, scoped, tag = 'scoped memory for tpu_custom_call.1']
    %8 = vsyncpa [#allocation3], 0
    // Predicated region
    $region2: #{tpu_custom_call.1} parent=1 // pred_check
      _
    $region3: #{tpu_custom_call.1} parent=1 // pred_check_branch
      %10 = sbr.rel (0) target = $region5
    $region4: #{tpu_custom_call.1} parent=1 // pred_region
      _
    $region5: #{tpu_custom_call.1} parent=1 // pred_fallthru
      _
    // Predicated region
    $region6: #{tpu_custom_call.1} parent=1 // pred_check
      _
    $region7: #{tpu_custom_call.1} parent=1 // pred_check_branch
      %12 = sbr.rel (0) target = $region9
    $region8: #{tpu_custom_call.1} parent=1 // pred_region
      _
    $region9: #{tpu_custom_call.1} parent=1 // pred_fallthru
      _
    // Predicated region
    $region10: #{tpu_custom_call.1} parent=1 // pred_check
      _
    $region11: #{tpu_custom_call.1} parent=1 // pred_check_branch
      %14 = sbr.rel (0) target = $region13
    $region12: #{tpu_custom_call.1} parent=1 // pred_region
      _
    $region13: #{tpu_custom_call.1} parent=1 // pred_fallthru
      _
    %v15 = vld [vmem:[%s0] sm:$0xff]
    %v16 = vld [vmem:[%s1] sm:$0x1]
    %18 = vset.pattern.permute.xlu0 0
    %19 = vperm.xlu0 %18, %v15
    %v20 = vpop.permute.xlu0 %19
    %v23 = vlaneseq
    %v24 = vshrl.u32 %v23, 7
    %v25 = vsub.s32 0, %v24
    %v26 = vrot.slane %v16, %v25
    %v28 = vmul.f32 %v20, %v26
    %v29 = vld [vmem:[%s2] sm:$0x1]
    %v31 = vlaneseq
    %v32 = vshrl.u32 %v31, 7
    %v33 = vsub.s32 0, %v32
    %v34 = vrot.slane %v29, %v33
    %v36 = vadd.f32 %v28, %v34
    %v37 = vand.u32 2147483647, %v36
    %vm38 = vcmp.le.f32.partialorder %v37, 0.7853982
    %vm39 = vcmp.lt.s32.totalorder %v36, 0
    %v40 = vand.u32 %v36, 2139095040
    %v41 = vshrl.u32 %v40, 23
    %v42 = vsub.s32 %v41, 127
    %v43 = vand.u32 2147483647, %v36
    %v44 = vand.u32 %v43, 8388607
    %v45 = vor.u32 %v44, 8388608
    %v46 = vsub.s32 0, %v45
    %v47 = vadd.s32 %v42, 1
    %vm48 = vcmp.gt.s32.totalorder %v47, 0
    %v49 = vsel %vm48, %v47, 0
    %v50 = vshrl.u32 %v49, 5
    %v51 = vand.u32 %v49, 31
    %v52 = vsub.s32 32, %v51
    %v53 = vshrl.u32 683565275, %v52
    %v54 = vshll.u32 683565275, %v51
    %v55 = vshrl.u32 2475754826, %v52
    %v56 = vor.u32 %v54, %v55
    %v57 = vshll.u32 2475754826, %v51
    %v58 = vshrl.u32 2131351028, %v52
    %v59 = vor.u32 %v57, %v58
    %v60 = vshll.u32 2131351028, %v51
    %v61 = vshrl.u32 2102212464, %v52
    %v62 = vor.u32 %v60, %v61
    %v63 = vshll.u32 2102212464, %v51
    %v64 = vshrl.u32 920167782, %v52
    %v65 = vor.u32 %v63, %v64
    %v66 = vshll.u32 920167782, %v51
    %v67 = vshrl.u32 1326507024, %v52
    %v68 = vor.u32 %v66, %v67
    %vm69 = vcmp.lt.s32.totalorder %v50, 1
    %vm70 = vcmp.lt.s32.totalorder %v50, 2
    %vm71 = vcmp.lt.s32.totalorder %v50, 3
    %vm72 = vcmp.lt.s32.totalorder %v50, 4
    %v73 = vsel %vm69, %v53, %v56
    %v74 = vsel %vm72, %v62, 2102212464
    %v75 = vsel %vm71, %v59, %v74
    %v76 = vsel %vm70, %v73, %v75
    %v77 = vsel %vm69, %v56, %v59
    %v78 = vsel %vm72, %v65, 920167782
    %v79 = vsel %vm71, %v62, %v78
    %v80 = vsel %vm70, %v77, %v79
    %v81 = vsel %vm69, %v59, %v62
    %v82 = vsel %vm72, %v68, 1326507024
    %v83 = vsel %vm71, %v65, %v82
    %v84 = vsel %vm70, %v81, %v83
    %v85 = vshll.u32 %v45, 8
    %v86 = vmul.u32.u64.compose %v85, %v84
    %v87 = vextract.low.u32 %v86
    %v88 = vextract.high.u32 %v86
    %v89 = vmul.u32.u64.compose %v85, %v80
    %v90 = vextract.low.u32 %v89
    %v91 = vextract.high.u32 %v89
    %v92 = vmul.u32 %v85, %v76
    %v93 = vadd.s32 %v88, %v90
    %vm94 = vc.u32 %v88, %v90
    %v95 = vadd.s32 %v91, 1
    %v96 = vsel %vm94, %v95, %v91
    %v97 = vadd.s32 %v92, %v96
    %v98 = vadd.s32 %v97, 536870912
    %v99 = vshrl.u32 %v98, 30
    %v100 = vshll.u32 %v99, 30
    %v101 = vsub.s32 %v97, %v100
    %vm102 = vcmp.lt.s32.totalorder %v101, 0
    %v103 = vsub.s32 0, %v101
    %v104 = vsel %vm102, %v103, %v101
    %v105 = vclz %v104
    %v106 = vsub.s32 %v105, 2
    %vm107 = vcmp.gt.s32.totalorder 0, %v106
    %v108 = vsel %vm107, 0, %v106
    %v109 = vsub.s32 32, %v108
    %v110 = vshll.u32 %v101, %v108
    %v111 = vshrl.u32 %v93, %v109
    %v112 = vor.u32 %v110, %v111
    %v113 = vsub.s32 4294967266, %v108
    %v114 = vadd.s32 %v113, 127
    %v115 = vshll.u32 %v114, 23
    %v116 = vor.u32 4788187, %v115
    %v117 = vand.u32 2147483647, %v116
    %v119 = vcvt.s32.f32 %v112
    %v120 = vmul.f32 %v119, %v117
    %v121 = vxor.u32 %v120, 2147483648
    %v122 = vsel %vm39, %v121, %v120
    %v123 = vsub.s32 4, %v99
    %v124 = vsel %vm39, %v123, %v99
    %v125 = vsel %vm38, %v36, %v122
    %v126 = vsel %vm38, 0, %v124
    %v127 = vcosq.f32.pop %v125
    %v128 = vsinq.f32.pop %v125
    %vm129 = vweird.f32 %v36
    %v130 = vadd.s32 %v126, 3
    %v131 = vand.u32 %v130, 3
    %vm132 = vcmp.lt.s32.totalorder %v131, 2
    %vm133 = vcmp.eq.s32.totalorder %v131, 0
    %v134 = vxor.u32 %v128, 2147483648
    %v135 = vsel %vm133, %v127, %v134
    %vm136 = vcmp.eq.s32.totalorder %v131, 2
    %v137 = vxor.u32 %v127, 2147483648
    %v138 = vsel %vm136, %v137, %v128
    %v139 = vsel %vm132, %v135, %v138
    %v140 = vsel %vm129, nan, %v139
    %vm141 = vcmask 261120
    %142 = vst.msk [vmem:[#allocation2] sm:$0xff] %vm141, %v140
    // Predicated region
    $region14: #{tpu_custom_call.1} parent=1 // pred_check
      _
    $region15: #{tpu_custom_call.1} parent=1 // pred_check_branch
      %144 = sbr.rel (0) target = $region17
    $region16: #{tpu_custom_call.1} parent=1 // pred_region
      %s146 = ssub.s32 128, 128
      %147 = vsyncadd [#allocation3], %s146
      %s149 = sshll.u32 [#allocation2], 4
      %s150 = int_to_ptr.vmem [resolvable:$true] %s149
      %152 = dma.vmem_to_hbm [thread:$0]  %s150, 128, %s3, [#allocation3]
    $region17: #{tpu_custom_call.1} parent=1 // pred_fallthru
      _
    // Predicated region
    $region18: #{tpu_custom_call.1} parent=1 // pred_check
      _
    $region19: #{tpu_custom_call.1} parent=1 // pred_check_branch
      %154 = sbr.rel (0) target = $region21
    $region20: #{tpu_custom_call.1} parent=1 // pred_region
      %155 = dma.done [#allocation3], 128
    $region21: #{tpu_custom_call.1} parent=1 // pred_fallthru
      _
    %156 = vsyncpa [#allocation3], 1

</llo_original>
